<compile_context>
chip_gen: v7x
topology: tpu7x:2x2x1
jax: 0.10.0
libtpu: 0.0.40
codegen_flags: <defaults>
</compile_context>

<pallas_src>
import jax
import jax.numpy as jnp
from jax import lax
from jax.experimental import pallas as pl
from jax.experimental.pallas import tpu as pltpu

EPS = 1e-5  # nn.BatchNorm2d default eps


def _round_up(x, m):
    return (x + m - 1) // m * m


def _kernel(p_ref, w_ref, s_ref, o_ref):
    """One (batch, spatial-tile) grid step: pure MXU matmul + shift + store.

    p_ref: (1, K9, TN)  im2col patches (K on sublanes, spatial on lanes)
    w_ref: (Cb, K9)     conv weight, rows tiled by rep_beta, BN scale folded in
    s_ref: (Cb, 1)      folded BatchNorm shift
    o_ref: (1, Cb, TN)  lane-dense output slab (flattened-NCHW)
    """
    y = jnp.dot(w_ref[...], p_ref[0], preferred_element_type=jnp.float32)  # (Cb, TN)
    o_ref[0] = y + s_ref[...]


def firstconv3x3_pallas(x_nchw, conv_w, bn, *, stride=1, rep_beta=1, tile_n=1024):
    """firstconv3x3 forward: conv3x3(pad=1) -> repeat channels -> BatchNorm (eval)."""
    B, Cin, H, W = x_nchw.shape
    oup = conv_w.shape[0]
    assert conv_w.shape == (oup, Cin, 3, 3)
    Cb = oup * rep_beta
    S = int(stride)
    Ho = (H - 1) // S + 1           # output size for k=3, pad=1
    Wo = (W - 1) // S + 1
    K9 = 9 * Cin

    # ---- host-side im2col (channel-major, K on the slow axis) --------------
    # Strided tap extraction happens here (plain XLA slices), so the kernel has
    # zero cross-lane relayout work even for stride-2 stems.
    xp = jnp.pad(x_nchw.astype(jnp.float32), ((0, 0), (0, 0), (1, 1), (1, 1)))
    taps = []
    for kh in range(3):
        for kw in range(3):
            taps.append(lax.slice(
                xp, (0, 0, kh, kw),
                (B, Cin, kh + (Ho - 1) * S + 1, kw + (Wo - 1) * S + 1),
                (1, 1, S, S)))                                  # (B, Cin, Ho, Wo)
    patches = jnp.stack(taps, axis=1).reshape(B, K9, Ho * Wo)   # K order = (tap, cin)

    # Spatial tiling: TN multiple of 128 (unmasked lane-dense stores); pad N up.
    N = Ho * Wo
    TN = _round_up(min(int(tile_n), _round_up(N, 128)), 128)
    Npad = _round_up(N, TN)
    if Npad != N:
        patches = jnp.pad(patches, ((0, 0), (0, 0), (0, Npad - N)))

    # ---- weight: fold repeat() (row tiling) + BatchNorm scale ---------------
    scale = (bn['gamma'] / jnp.sqrt(bn['var'] + EPS)).astype(jnp.float32)      # (Cb,)
    shift = (bn['beta'] - bn['mean'] * scale).astype(jnp.float32).reshape(Cb, 1)
    # (oup, Cin, 3, 3) -> (kh, kw, cin, oup) -> (K9, oup) -> (oup, K9), rows tiled.
    w_t = jnp.transpose(conv_w.astype(jnp.float32), (2, 3, 1, 0)).reshape(K9, oup)
    w_big = jnp.tile(w_t.T, (rep_beta, 1)) * scale[:, None]                    # (Cb, K9)

    # ---- VMEM budget from actual (padded, double-buffered) block footprints --
    k9_sub = _round_up(K9, 8)
    k9_lane = _round_up(K9, 128)
    cb_sub = _round_up(Cb, 8)
    blk_bytes = 4 * (2 * k9_sub * TN          # patches blocks (double-buffered)
                     + 2 * cb_sub * k9_lane   # weight (constant block)
                     + 2 * cb_sub * 128       # shift
                     + 2 * cb_sub * TN)       # output blocks
    vmem_limit = int(min(48 * 1024 * 1024, max(4 * 1024 * 1024, 2 * blk_bytes)))

    grid = (B, Npad // TN)
    out = pl.pallas_call(
        _kernel,
        out_shape=jax.ShapeDtypeStruct((B, Cb, Npad), jnp.float32),
        grid_spec=pltpu.PrefetchScalarGridSpec(
            num_scalar_prefetch=0,
            grid=grid,
            in_specs=[
                pl.BlockSpec((1, K9, TN), lambda b, t: (b, 0, t)),  # im2col patches
                pl.BlockSpec((Cb, K9), lambda b, t: (0, 0)),        # folded weight
                pl.BlockSpec((Cb, 1), lambda b, t: (0, 0)),         # BN shift
            ],
            out_specs=pl.BlockSpec((1, Cb, TN), lambda b, t: (b, 0, t)),
        ),
        compiler_params=pltpu.CompilerParams(
            # Both axes are independent (no carried accumulator): lets v7x shard
            # spatial tiles across its 2 TensorCores even at batch=1.
            dimension_semantics=("parallel", "parallel"),
            vmem_limit_bytes=vmem_limit),
    )(patches, w_big, shift)

    # Slice off spatial padding; reshape (B, Cb, Ho*Wo) -> NCHW is free.
    return out[:, :, :N].reshape(B, Cb, Ho, Wo)


# ----------------------------- pure-JAX reference -----------------------------
def reference(x, conv_w, bn, stride, rep_beta):
    y = lax.conv_general_dilated(x, conv_w, (stride, stride), ((1, 1), (1, 1)),
                                 dimension_numbers=('NCHW', 'OIHW', 'NCHW'))
    y = jnp.tile(y, (1, rep_beta, 1, 1))
    s = (bn['gamma'] / jnp.sqrt(bn['var'] + EPS)).reshape(1, -1, 1, 1)
    b = (bn['beta'] - bn['mean'] * bn['gamma'] / jnp.sqrt(bn['var'] + EPS)).reshape(1, -1, 1, 1)
    return y * s + b


if __name__ == "__main__":
    key = jax.random.PRNGKey(0)
    B, Cin, H, W = 2, 3, 16, 16
    oup, rep_beta = 32, 4                 # Cout = oup*rep_beta = 128
    Cb = oup * rep_beta

    ks = jax.random.split(key, 6)
    x = jax.random.normal(ks[0], (B, Cin, H, W), jnp.float32)
    w = 0.1 * jax.random.normal(ks[1], (oup, Cin, 3, 3), jnp.float32)
    bn = {'gamma': 1.0 + 0.1 * jax.random.normal(ks[2], (Cb,)),
          'beta': 0.1 * jax.random.normal(ks[3], (Cb,)),
          'mean': 0.1 * jax.random.normal(ks[4], (Cb,)),
          'var': 0.5 + 0.5 * jax.random.uniform(ks[5], (Cb,))}
    # TODO(synk): training-mode BatchNorm (batch statistics + running-stat updates) is not
    # modeled; eval-mode forward values only.  self.prelu is unused in forward() -> omitted.

    for stride in (1, 2):                 # stride-2 also exercises the N-padding path
        out = jax.block_until_ready(firstconv3x3_pallas(
            x, w, bn, stride=stride, rep_beta=rep_beta))
        ref = jax.block_until_ready(reference(x, w, bn, stride, rep_beta))
        err = float(jnp.max(jnp.abs(out - ref)))
        assert err < 1e-3, f"stride={stride}: mismatch vs reference, max abs err = {err}"
    print("KERNEL_OK")
</pallas_src>

<mosaic_0001>
module attributes {stable_mosaic.version = 11 : i64} {
  func.func @_kernel(%arg0: i32, %arg1: i32, %arg2: memref<1x27x256xf32, #tpu.memory_space<vmem>>, %arg3: memref<128x27xf32, #tpu.memory_space<vmem>>, %arg4: memref<128x1xf32, #tpu.memory_space<vmem>>, %arg5: memref<1x128x256xf32, #tpu.memory_space<vmem>>) attributes {dimension_semantics = [#tpu.dimension_semantics<parallel>, #tpu.dimension_semantics<parallel>], iteration_bounds = array<i64: 2, 1>, scalar_prefetch = 0 : i64, scratch_operands = 0 : i64, tpu.core_type = #tpu.core_type<tc>, window_params = [{transform_indices = @transform_0, window_bounds = array<i64: 1, 27, 256>}, {pipeline_mode = #tpu.pipeline_mode<synchronous>, transform_indices = @transform_1, window_bounds = array<i64: 128, 27>}, {pipeline_mode = #tpu.pipeline_mode<synchronous>, transform_indices = @transform_2, window_bounds = array<i64: 128, 1>}, {transform_indices = @transform_3, window_bounds = array<i64: 1, 128, 256>}]} {
    %c0 = arith.constant 0 : index
    %c0_0 = arith.constant 0 : index
    %0 = vector.load %arg3[%c0, %c0_0] : memref<128x27xf32, #tpu.memory_space<vmem>>, vector<128x27xf32>
    %c0_1 = arith.constant 0 : index
    %c0_2 = arith.constant 0 : index
    %c0_3 = arith.constant 0 : index
    %1 = vector.load %arg2[%c0_1, %c0_2, %c0_3] : memref<1x27x256xf32, #tpu.memory_space<vmem>>, vector<1x27x256xf32>
    %2 = vector.shape_cast %1 : vector<1x27x256xf32> to vector<27x256xf32>
    %cst = arith.constant dense<0.000000e+00> : vector<128x256xf32>
    %3 = tpu.matmul %0, %2, %cst {dimension_numbers = #tpu.dot_dimension_numbers<[1], [0], [0], [1], [0, 0, 1, 1], [], []>} : vector<128x27xf32>, vector<27x256xf32>, vector<128x256xf32> -> vector<128x256xf32>
    %c0_4 = arith.constant 0 : index
    %c0_5 = arith.constant 0 : index
    %4 = vector.load %arg4[%c0_4, %c0_5] : memref<128x1xf32, #tpu.memory_space<vmem>>, vector<128x1xf32>
    %5 = vector.broadcast %4 : vector<128x1xf32> to vector<128x256xf32>
    %6 = arith.addf %3, %5 : vector<128x256xf32>
    %c0_6 = arith.constant 0 : index
    %c0_7 = arith.constant 0 : index
    %c0_8 = arith.constant 0 : index
    %7 = vector.load %arg5[%c0_6, %c0_7, %c0_8] : memref<1x128x256xf32, #tpu.memory_space<vmem>>, vector<1x128x256xf32>
    %8 = vector.shape_cast %7 : vector<1x128x256xf32> to vector<128x256xf32>
    %9 = vector.shape_cast %6 : vector<128x256xf32> to vector<1x128x256xf32>
    tpu.vector_store %arg5[%c0_6, %c0_7, %c0_8], %9 {strides = array<i32>} : memref<1x128x256xf32, #tpu.memory_space<vmem>>, vector<1x128x256xf32>,
    return
  }
  func.func @transform_0(%arg0: i32, %arg1: i32) -> (i32, i32, i32) {
    %c0_i32 = arith.constant 0 : i32
    %c0_i32_0 = arith.constant 0 : i32
    return %arg0, %c0_i32, %arg1 : i32, i32, i32
  }
  func.func @transform_1(%arg0: i32, %arg1: i32) -> (i32, i32) {
    %c0_i32 = arith.constant 0 : i32
    %c0_i32_0 = arith.constant 0 : i32
    %c0_i32_1 = arith.constant 0 : i32
    return %c0_i32, %c0_i32_0 : i32, i32
  }
  func.func @transform_2(%arg0: i32, %arg1: i32) -> (i32, i32) {
    %c0_i32 = arith.constant 0 : i32
    %c0_i32_0 = arith.constant 0 : i32
    %c0_i32_1 = arith.constant 0 : i32
    return %c0_i32, %c0_i32_0 : i32, i32
  }
  func.func @transform_3(%arg0: i32, %arg1: i32) -> (i32, i32, i32) {
    %c0_i32 = arith.constant 0 : i32
    %c0_i32_0 = arith.constant 0 : i32
    return %arg0, %c0_i32, %arg1 : i32, i32, i32
  }
}

</mosaic_0001>

<llo_original>
// kernel: tpu_custom_call.1
$region0: #{tpu_custom_call.1}
  #allocation0 [shape = 'u32[]', space=smem, size = 0x4, offset = 0x4, fixed_abs, tag = 'smem constant byte address 0x4 - core index']
  #allocation1 [shape = 'u32[144,128]{1,0:T(1,128)}', space=vmem, size = 0x12000, scoped, tag = 'internal scratch']
  %s0 = inlined_call_operand.vmem [shape: f32[2,27,256], index: 0, kind: input, shape index: {}]
  %s1 = inlined_call_operand.vmem [shape: f32[128,27], index: 1, kind: input, shape index: {}]
  %s2 = inlined_call_operand.vmem [shape: f32[128,1], index: 2, kind: input, shape index: {}]
  %s3 = inlined_call_operand.hbm [shape: f32[2,128,256], index: 3, kind: output, shape index: {}]
  %s4 = sld [smem:[#allocation0]]
  $region45: #{tpu_custom_call.1} parent=0
    _
  %s6 = ssub.s32 1, %s4
  %s7 = scalar_select 0, %s6, %s4
  $region1: #{tpu_custom_call.1} parent=0
    #allocation2 [shape = 'u8[262144]{0}', space=vmem, size = 0x40000, scoped, tag = 'output window, operand 0']
    #allocation3 [shape = 's32[2]{0}', space=sflag, size = 0x8, scoped, tag = 'scoped memory for tpu_custom_call.1']
    %8 = vsyncpa [#allocation3], 0
    %s9 = scalar_lea.sflag [#allocation3], 1
    %10 = vsyncpa %s9, 0
    loop: start=0, step=1, limit=4
    $region2: #{tpu_custom_call.1} parent=1 // loop_pre_header
      _
    $region3: #{tpu_custom_call.1} parent=1 // loop_header
      %s12 = sphi 0, %s16
      %p13 = scmp.ge.s32.totalorder %s12, 4
      %s19 = sphi 0, %s31
      %s20 = sphi 0, %s27
      %s21 = sphi 0, %s19
      %s22 = sphi 0, %s20
      %s23 = sphi 0, %s21
      %s24 = sphi 0, %s22
      %s36 = sphi 0, %s38
      %s39 = sphi 0, %s36
      %s40 = sphi 0, %s39
      %s56 = sphi 0, %s40
      %s60 = sphi 0, %s60
      %s62 = sphi 0, %s60
      %s63 = sphi 0, %s62
      %s77 = sphi 0, %s63
      %s81 = sphi 0, %s81
      %s83 = sphi 0, %s81
      %s84 = sphi 0, %s83
      %s98 = sphi 0, %s84
      %s106 = sphi 0, %s108
      %s109 = sphi 0, %s106
      %s110 = sphi 0, %s109
      %s126 = sphi 0, %s110
    $region4: #{tpu_custom_call.1} parent=1 // loop_header_branch
      %15 = sbr.rel (%p13) target = $region8
    $region5: #{tpu_custom_call.1} parent=1 // loop_body
      %s17 = ssub.s32 %s12, 1
      %s18 = ssub.s32 %s12, 2
      %s25 = sadd.s32 1, %s20
      %p26 = scmp.ge.s32.totalorder %s25, 1
      %s27 = scalar_select %p26, 0, %s25
      %s28 = sadd.s32 1, %s19
      %s29 = scalar_select %p26, %s28, %s19
      %p30 = scmp.ge.s32.totalorder %s29, 2
      %s31 = scalar_select %p30, 0, %s29
      %s32 = ssub.s32 %s19, %s31
      %s33 = ssub.s32 %s20, %s27
      %s34 = sor.u32 %s32, %s33
      %p35 = scmp.eq.s32.totalorder %s34, 0
      %s37 = sadd.s32 %s36, 1
      %s38 = scalar_select %p35, %s36, %s37
      %p41 = pneg %p35
      %p42 = scmp.eq.s32.totalorder %s12, 1
      %p43 = por %p41, %p42
      %p44 = scmp.ne.s32.totalorder %s36, %s39
      %p45 = scmp.eq.s32.totalorder %s12, 0
      %p46 = por %p44, %p45
      %p47 = scmp.ne.s32.totalorder %s36, %s39
      %p48 = scmp.eq.s32.totalorder %s17, 1
      %p49 = por %p47, %p48
      %p50 = scmp.ne.s32.totalorder %s39, %s40
      %p51 = scmp.eq.s32.totalorder %s17, 0
      %p52 = por %p50, %p51
      %p53 = scmp.ne.s32.totalorder %s39, %s40
      %p54 = scmp.eq.s32.totalorder %s18, 1
      %p55 = por %p53, %p54
      %p57 = scmp.ne.s32.totalorder %s40, %s56
      %p58 = scmp.eq.s32.totalorder %s18, 0
      %p59 = por %p57, %p58
      %s61 = sadd.s32 %s60, 1
      %p64 = scmp.eq.s32.totalorder %s12, 1
      %p65 = scmp.ne.s32.totalorder %s60, %s62
      %p66 = scmp.eq.s32.totalorder %s12, 0
      %p67 = por %p65, %p66
      %p68 = scmp.ne.s32.totalorder %s60, %s62
      %p69 = scmp.eq.s32.totalorder %s17, 1
      %p70 = por %p68, %p69
      %p71 = scmp.ne.s32.totalorder %s62, %s63
      %p72 = scmp.eq.s32.totalorder %s17, 0
      %p73 = por %p71, %p72
      %p74 = scmp.ne.s32.totalorder %s62, %s63
      %p75 = scmp.eq.s32.totalorder %s18, 1
      %p76 = por %p74, %p75
      %p78 = scmp.ne.s32.totalorder %s63, %s77
      %p79 = scmp.eq.s32.totalorder %s18, 0
      %p80 = por %p78, %p79
      %s82 = sadd.s32 %s81, 1
      %p85 = scmp.eq.s32.totalorder %s12, 1
      %p86 = scmp.ne.s32.totalorder %s81, %s83
      %p87 = scmp.eq.s32.totalorder %s12, 0
      %p88 = por %p86, %p87
      %p89 = scmp.ne.s32.totalorder %s81, %s83
      %p90 = scmp.eq.s32.totalorder %s17, 1
      %p91 = por %p89, %p90
      %p92 = scmp.ne.s32.totalorder %s83, %s84
      %p93 = scmp.eq.s32.totalorder %s17, 0
      %p94 = por %p92, %p93
      %p95 = scmp.ne.s32.totalorder %s83, %s84
      %p96 = scmp.eq.s32.totalorder %s18, 1
      %p97 = por %p95, %p96
      %p99 = scmp.ne.s32.totalorder %s84, %s98
      %p100 = scmp.eq.s32.totalorder %s18, 0
      %p101 = por %p99, %p100
      %s102 = ssub.s32 %s19, %s31
      %s103 = ssub.s32 %s20, %s27
      %s104 = sor.u32 %s102, %s103
      %p105 = scmp.eq.s32.totalorder %s104, 0
      %s107 = sadd.s32 %s106, 1
      %s108 = scalar_select %p105, %s106, %s107
      %p111 = pneg %p105
      %p112 = scmp.eq.s32.totalorder %s12, 1
      %p113 = por %p111, %p112
      %p114 = scmp.ne.s32.totalorder %s106, %s109
      %p115 = scmp.eq.s32.totalorder %s12, 0
      %p116 = por %p114, %p115
      %p117 = scmp.ne.s32.totalorder %s106, %s109
      %p118 = scmp.eq.s32.totalorder %s17, 1
      %p119 = por %p117, %p118
      %p120 = scmp.ne.s32.totalorder %s109, %s110
      %p121 = scmp.eq.s32.totalorder %s17, 0
      %p122 = por %p120, %p121
      %p123 = scmp.ne.s32.totalorder %s109, %s110
      %p124 = scmp.eq.s32.totalorder %s18, 1
      %p125 = por %p123, %p124
      %p127 = scmp.ne.s32.totalorder %s110, %s126
      %p128 = scmp.eq.s32.totalorder %s18, 0
      %p129 = por %p127, %p128
      %p130 = scmp.le.s32.totalorder 1, %s12
      %p131 = scmp.lt.s32.totalorder %s12, 3
      %p132 = pnand %p130, %p131
      %p133 = pneg %p132
      // Predicated region
      $region9: #{tpu_custom_call.1} parent=5 // pred_check
        _
      $region10: #{tpu_custom_call.1} parent=5 // pred_check_branch
        %135 = sbr.rel (%p132) target = $region12
      $region11: #{tpu_custom_call.1} parent=5 // pred_region
        %s136 = ssub.s32 %s12, 1
        // Predicated region
        $region13: #{tpu_custom_call.1} parent=11 // pred_check
          %p137 = pneg %p73
        $region14: #{tpu_custom_call.1} parent=11 // pred_check_branch
          %139 = sbr.rel (%p137) target = $region16
        $region15: #{tpu_custom_call.1} parent=11 // pred_region
          _
        $region16: #{tpu_custom_call.1} parent=11 // pred_fallthru
          _
        // Predicated region
        $region17: #{tpu_custom_call.1} parent=11 // pred_check
          %p140 = pneg %p94
        $region18: #{tpu_custom_call.1} parent=11 // pred_check_branch
          %142 = sbr.rel (%p140) target = $region20
        $region19: #{tpu_custom_call.1} parent=11 // pred_region
          _
        $region20: #{tpu_custom_call.1} parent=11 // pred_fallthru
          _
      $region12: #{tpu_custom_call.1} parent=5 // pred_fallthru
        _
      %p143 = scmp.lt.s32.totalorder %s12, 2
      // Predicated region
      $region21: #{tpu_custom_call.1} parent=5 // pred_check
        %p144 = pneg %p143
      $region22: #{tpu_custom_call.1} parent=5 // pred_check_branch
        %146 = sbr.rel (%p144) target = $region24
      $region23: #{tpu_custom_call.1} parent=5 // pred_region
        // Predicated region
        $region25: #{tpu_custom_call.1} parent=23 // pred_check
          %p147 = pneg %p46
        $region26: #{tpu_custom_call.1} parent=23 // pred_check_branch
          %149 = sbr.rel (%p147) target = $region28
        $region27: #{tpu_custom_call.1} parent=23 // pred_region
          %s150 = smul.u32 2, %s20
          %p151 = scmp.lt.s32.totalorder %s19, 1
          %s152 = scalar_select %p151, %s19, 1
          %p153 = scmp.lt.s32.totalorder %s150, 1
          %s154 = scalar_select %p153, %s150, 1
          %s155 = smul.addr %s152, 8
          %s156 = sadd.s32 %s154, %s155
          %s157 = smul.addr %s156, 8
          %s158 = scalar_lea.vmem %s0, %s157
          %s159 = smul.u32 2, %s20
        $region28: #{tpu_custom_call.1} parent=23 // pred_fallthru
          _
      $region24: #{tpu_custom_call.1} parent=5 // pred_fallthru
        _
      %p160 = scmp.le.s32.totalorder 1, %s12
      %p161 = scmp.lt.s32.totalorder %s12, 3
      %p162 = pnand %p160, %p161
      %p163 = pneg %p162
      // Predicated region
      $region29: #{tpu_custom_call.1} parent=5 // pred_check
        _
      $region30: #{tpu_custom_call.1} parent=5 // pred_check_branch
        %165 = sbr.rel (%p162) target = $region32
      $region31: #{tpu_custom_call.1} parent=5 // pred_region
        %s166 = ssub.s32 %s12, 1
        %s167 = smul.u32 2, %s22
        %p168 = scmp.lt.s32.totalorder %s21, 1
        %s169 = scalar_select %p168, %s21, 1
        %p170 = scmp.lt.s32.totalorder %s167, 1
        %s171 = scalar_select %p170, %s167, 1
        %s172 = smul.addr %s169, 8
        %s173 = sadd.s32 %s171, %s172
        %s174 = smul.addr %s173, 8
        %s175 = scalar_lea.vmem %s0, %s174
        %p176 = pneg %p52
        %p177 = pneg %p49
        %p178 = pneg %p73
        %p179 = pneg %p70
        %p180 = pneg %p94
        %p181 = pneg %p91
        %p182 = pneg %p122
        %p183 = pneg %p119
        %s184 = sand.u32 %s109, 1
        %s185 = scalar_lea.sflag [#allocation3], %s184
        %s186 = sand.u32 %s109, 1
        %s187 = smul.addr %s186, 256
        %s188 = scalar_lea.vmem [#allocation2], %s187
        %s189 = smul.u32 2, %s22
        %p190 = scmp.lt.s32.totalorder %s21, 1
        %s191 = scalar_select %p190, %s21, 1
        %p192 = scmp.lt.s32.totalorder %s189, 1
        %s193 = scalar_select %p192, %s189, 1
        %s194 = smul.addr %s191, 8
        %s195 = sadd.s32 %s193, %s194
        %s196 = smul.addr %s195, 8
        %s197 = scalar_lea.vmem %s0, %s196
        %s198 = smul.u32 2, %s22
        %s199 = smul.u32 2, %s22
        %v200 = vld [vmem:[%s1] sm:$0xff]
        %v201 = vld [vmem:[%s1 + $0x8] sm:$0xff]
        %v202 = vld [vmem:[%s1 + $0x10] sm:$0xff]
        %v203 = vld [vmem:[%s1 + $0x18] sm:$0xff]
        %v204 = vld [vmem:[%s1 + $0x20] sm:$0xff]
        %v205 = vld [vmem:[%s1 + $0x28] sm:$0xff]
        %v206 = vld [vmem:[%s1 + $0x30] sm:$0xff]
        %v207 = vld [vmem:[%s1 + $0x38] sm:$0xff]
        %v208 = vld [vmem:[%s1 + $0x40] sm:$0xff]
        %v209 = vld [vmem:[%s1 + $0x48] sm:$0xff]
        %v210 = vld [vmem:[%s1 + $0x50] sm:$0xff]
        %v211 = vld [vmem:[%s1 + $0x58] sm:$0xff]
        %v212 = vld [vmem:[%s1 + $0x60] sm:$0xff]
        %v213 = vld [vmem:[%s1 + $0x68] sm:$0xff]
        %v214 = vld [vmem:[%s1 + $0x70] sm:$0xff]
        %v215 = vld [vmem:[%s1 + $0x78] sm:$0xff]
        %v216 = vld [vmem:[%s197] sm:$0xff]
        %v217 = vld [vmem:[%s197 + $0x8] sm:$0xff]
        %v218 = vld [vmem:[%s197 + $0x10] sm:$0xff]
        %v219 = vld [vmem:[%s197 + $0x18] sm:$0xff]
        %v220 = vld [vmem:[%s197 + $0x20] sm:$0xff]
        %v221 = vld [vmem:[%s197 + $0x28] sm:$0xff]
        %v222 = vld [vmem:[%s197 + $0x30] sm:$0x7]
        %v223 = vld [vmem:[%s197 + $0x38] sm:$0x7]
        %v224 = vld [vmem:[%s2] sm:$0xff]
        %v225 = vld [vmem:[%s2 + $0x8] sm:$0xff]
        %v226 = vld [vmem:[%s2 + $0x10] sm:$0xff]
        %v227 = vld [vmem:[%s2 + $0x18] sm:$0xff]
        %v228 = vld [vmem:[%s2 + $0x20] sm:$0xff]
        %v229 = vld [vmem:[%s2 + $0x28] sm:$0xff]
        %v230 = vld [vmem:[%s2 + $0x30] sm:$0xff]
        %v231 = vld [vmem:[%s2 + $0x38] sm:$0xff]
        %v232 = vld [vmem:[%s2 + $0x40] sm:$0xff]
        %v233 = vld [vmem:[%s2 + $0x48] sm:$0xff]
        %v234 = vld [vmem:[%s2 + $0x50] sm:$0xff]
        %v235 = vld [vmem:[%s2 + $0x58] sm:$0xff]
        %v236 = vld [vmem:[%s2 + $0x60] sm:$0xff]
        %v237 = vld [vmem:[%s2 + $0x68] sm:$0xff]
        %v238 = vld [vmem:[%s2 + $0x70] sm:$0xff]
        %v239 = vld [vmem:[%s2 + $0x78] sm:$0xff]
        %241 = vset.pattern.permute.xlu0 0
        %242 = vperm.xlu0 %241, %v224
        %v243 = vpop.permute.xlu0 %242
        %246 = vset.pattern.permute.xlu0 0
        %247 = vperm.xlu0 %246, %v225
        %v248 = vpop.permute.xlu0 %247
        %251 = vset.pattern.permute.xlu0 0
        %252 = vperm.xlu0 %251, %v226
        %v253 = vpop.permute.xlu0 %252
        %256 = vset.pattern.permute.xlu0 0
        %257 = vperm.xlu0 %256, %v227
        %v258 = vpop.permute.xlu0 %257
        %261 = vset.pattern.permute.xlu0 0
        %262 = vperm.xlu0 %261, %v228
        %v263 = vpop.permute.xlu0 %262
        %266 = vset.pattern.permute.xlu0 0
        %267 = vperm.xlu0 %266, %v229
        %v268 = vpop.permute.xlu0 %267
        %271 = vset.pattern.permute.xlu0 0
        %272 = vperm.xlu0 %271, %v230
        %v273 = vpop.permute.xlu0 %272
        %276 = vset.pattern.permute.xlu0 0
        %277 = vperm.xlu0 %276, %v231
        %v278 = vpop.permute.xlu0 %277
        %281 = vset.pattern.permute.xlu0 0
        %282 = vperm.xlu0 %281, %v232
        %v283 = vpop.permute.xlu0 %282
        %286 = vset.pattern.permute.xlu0 0
        %287 = vperm.xlu0 %286, %v233
        %v288 = vpop.permute.xlu0 %287
        %291 = vset.pattern.permute.xlu0 0
        %292 = vperm.xlu0 %291, %v234
        %v293 = vpop.permute.xlu0 %292
        %296 = vset.pattern.permute.xlu0 0
        %297 = vperm.xlu0 %296, %v235
        %v298 = vpop.permute.xlu0 %297
        %301 = vset.pattern.permute.xlu0 0
        %302 = vperm.xlu0 %301, %v236
        %v303 = vpop.permute.xlu0 %302
        %306 = vset.pattern.permute.xlu0 0
        %307 = vperm.xlu0 %306, %v237
        %v308 = vpop.permute.xlu0 %307
        %311 = vset.pattern.permute.xlu0 0
        %312 = vperm.xlu0 %311, %v238
        %v313 = vpop.permute.xlu0 %312
        %316 = vset.pattern.permute.xlu0 0
        %317 = vperm.xlu0 %316, %v239
        %v318 = vpop.permute.xlu0 %317
        %vm320 = vcmask 220160
        %v322 = vsel %vm320, %v200, 0
        %v325 = vsel %vm320, %v201, 0
        %v328 = vsel %vm320, %v202, 0
        %v331 = vsel %vm320, %v203, 0
        %v334 = vsel %vm320, %v204, 0
        %v337 = vsel %vm320, %v205, 0
        %v340 = vsel %vm320, %v206, 0
        %v343 = vsel %vm320, %v207, 0
        %v346 = vsel %vm320, %v208, 0
        %v349 = vsel %vm320, %v209, 0
        %v352 = vsel %vm320, %v210, 0
        %v355 = vsel %vm320, %v211, 0
        %v358 = vsel %vm320, %v212, 0
        %v361 = vsel %vm320, %v213, 0
        %v364 = vsel %vm320, %v214, 0
        %v367 = vsel %vm320, %v215, 0
        %vm369 = vcmask 1042432
        %v371 = vsel %vm369, %v222, 0
        %v374 = vsel %vm369, %v223, 0
        %376 = vmatprep.subr.mxu0 %v217
        %377 = vmatpush1.msra.mxu0 %v216
        %378 = vmatprep.subr.mxu0 %v219
        %379 = vmatpush1.msra.mxu0 %v218
        %380 = vmatprep.subr.mxu0 %v221
        %381 = vmatpush1.msra.mxu0 %v220
        %382 = vmatprep.subr.mxu0 %v374
        %383 = vmatpush1.msra.mxu0 %v371
        %384 = vmatprep.subr.mxu0 0.0
        %385 = vmatpush1.msra.mxu0 0.0
        %386 = vmatprep.subr.mxu0 0.0
        %387 = vmatpush1.msra.mxu0 0.0
        %388 = vmatprep.subr.mxu0 0.0
        %389 = vmatpush1.msra.mxu0 0.0
        %390 = vmatprep.subr.mxu0 0.0
        %391 = vmatpush1.msra.mxu0 0.0
        %392 = vmatprep.subr.mxu0 0.0
        %393 = vmatpush1.msra.mxu0 0.0
        %394 = vmatprep.subr.mxu0 0.0
        %395 = vmatpush1.msra.mxu0 0.0
        %396 = vmatprep.subr.mxu0 0.0
        %397 = vmatpush1.msra.mxu0 0.0
        %398 = vmatprep.subr.mxu0 0.0
        %399 = vmatpush1.msra.mxu0 0.0
        %400 = vmatprep.subr.mxu0 0.0
        %401 = vmatpush1.msra.mxu0 0.0
        %402 = vmatprep.subr.mxu0 0.0
        %403 = vmatpush1.msra.mxu0 0.0
        %404 = vmatprep.subr.mxu0 0.0
        %405 = vmatpush1.msra.mxu0 0.0
        %406 = vmatprep.subr.mxu0 0.0
        %407 = vmatpush1.msra.mxu0 0.0
        %408 = vmatprep.subr.mxu0 0.0
        %409 = vmatpush1.msra.mxu0 0.0
        %410 = vmatprep.subr.mxu0 0.0
        %411 = vmatpush1.msra.mxu0 0.0
        %412 = vmatprep.subr.mxu0 0.0
        %413 = vmatpush1.msra.mxu0 0.0
        %414 = vmatprep.subr.mxu0 0.0
        %415 = vmatpush1.msra.mxu0 0.0
        %416 = vmatprep.subr.mxu0 0.0
        %417 = vmatpush1.msra.mxu0 0.0
        %418 = vmatprep.subr.mxu0 0.0
        %419 = vmatpush1.msra.mxu0 0.0
        %420 = vmatprep.subr.mxu0 0.0
        %421 = vmatpush1.msra.mxu0 0.0
        %422 = vmatprep.subr.mxu0 0.0
        %423 = vmatpush1.msra.mxu0 0.0
        %424 = vmatprep.subr.mxu0 0.0
        %425 = vmatpush1.msra.mxu0 0.0
        %426 = vmatprep.subr.mxu0 0.0
        %427 = vmatpush1.msra.mxu0 0.0
        %428 = vmatprep.subr.mxu0 0.0
        %429 = vmatpush1.msra.mxu0 0.0
        %430 = vmatprep.subr.mxu0 0.0
        %431 = vmatpush1.msra.mxu0 0.0
        %432 = vmatprep.subr.mxu0 0.0
        %433 = vmatpush1.msra.mxu0 0.0
        %434 = vmatprep.subr.mxu0 0.0
        %435 = vmatpush1.msra.mxu0 0.0
        %436 = vmatprep.subr.mxu0 0.0
        %437 = vmatpush1.msra.mxu0 0.0
        %438 = vmatprep.subr.mxu0 0.0
        %439 = vmatpush1.msra.mxu0 0.0
        %440 = vmatprep.mubr.f32.mxu0 0.0
        %441 = vmatmul.mubr.f32.gmra.mrb[0].mxu0 %v322
        %v442 = vpop.f32.mrb[0].mxu0
        %v443 = vadd.f32 %v243, %v442
        %v444 = vpop.f32.mrb[0].mxu0
        %v445 = vadd.f32 %v243, %v444
        %446 = vmatprep.mubr.f32.mxu0 0.0
        %447 = vmatmul.mubr.f32.gmra.mrb[0].mxu0 %v325
        %v448 = vpop.f32.mrb[0].mxu0
        %v449 = vadd.f32 %v248, %v448
        %v450 = vpop.f32.mrb[0].mxu0
        %v451 = vadd.f32 %v248, %v450
        %452 = vmatprep.mubr.f32.mxu0 0.0
        %453 = vmatmul.mubr.f32.gmra.mrb[0].mxu0 %v328
        %v454 = vpop.f32.mrb[0].mxu0
        %v455 = vadd.f32 %v253, %v454
        %v456 = vpop.f32.mrb[0].mxu0
        %v457 = vadd.f32 %v253, %v456
        %458 = vmatprep.mubr.f32.mxu0 0.0
        %459 = vmatmul.mubr.f32.gmra.mrb[0].mxu0 %v331
        %v460 = vpop.f32.mrb[0].mxu0
        %v461 = vadd.f32 %v258, %v460
        %v462 = vpop.f32.mrb[0].mxu0
        %v463 = vadd.f32 %v258, %v462
        %464 = vmatprep.mubr.f32.mxu0 0.0
        %465 = vmatmul.mubr.f32.gmra.mrb[0].mxu0 %v334
        %v466 = vpop.f32.mrb[0].mxu0
        %v467 = vadd.f32 %v263, %v466
        %v468 = vpop.f32.mrb[0].mxu0
        %v469 = vadd.f32 %v263, %v468
        %470 = vmatprep.mubr.f32.mxu0 0.0
        %471 = vmatmul.mubr.f32.gmra.mrb[0].mxu0 %v337
        %v472 = vpop.f32.mrb[0].mxu0
        %v473 = vadd.f32 %v268, %v472
        %v474 = vpop.f32.mrb[0].mxu0
        %v475 = vadd.f32 %v268, %v474
        %476 = vmatprep.mubr.f32.mxu0 0.0
        %477 = vmatmul.mubr.f32.gmra.mrb[0].mxu0 %v340
        %v478 = vpop.f32.mrb[0].mxu0
        %v479 = vadd.f32 %v273, %v478
        %v480 = vpop.f32.mrb[0].mxu0
        %v481 = vadd.f32 %v273, %v480
        %482 = vmatprep.mubr.f32.mxu0 0.0
        %483 = vmatmul.mubr.f32.gmra.mrb[0].mxu0 %v343
        %v484 = vpop.f32.mrb[0].mxu0
        %v485 = vadd.f32 %v278, %v484
        %v486 = vpop.f32.mrb[0].mxu0
        %v487 = vadd.f32 %v278, %v486
        %488 = vmatprep.mubr.f32.mxu0 0.0
        %489 = vmatmul.mubr.f32.gmra.mrb[0].mxu0 %v346
        %v490 = vpop.f32.mrb[0].mxu0
        %v491 = vadd.f32 %v283, %v490
        %v492 = vpop.f32.mrb[0].mxu0
        %v493 = vadd.f32 %v283, %v492
        %494 = vmatprep.mubr.f32.mxu0 0.0
        %495 = vmatmul.mubr.f32.gmra.mrb[0].mxu0 %v349
        %v496 = vpop.f32.mrb[0].mxu0
        %v497 = vadd.f32 %v288, %v496
        %v498 = vpop.f32.mrb[0].mxu0
        %v499 = vadd.f32 %v288, %v498
        %500 = vmatprep.mubr.f32.mxu0 0.0
        %501 = vmatmul.mubr.f32.gmra.mrb[0].mxu0 %v352
        %v502 = vpop.f32.mrb[0].mxu0
        %v503 = vadd.f32 %v293, %v502
        %v504 = vpop.f32.mrb[0].mxu0
        %v505 = vadd.f32 %v293, %v504
        %506 = vmatprep.mubr.f32.mxu0 0.0
        %507 = vmatmul.mubr.f32.gmra.mrb[0].mxu0 %v355
        %v508 = vpop.f32.mrb[0].mxu0
        %v509 = vadd.f32 %v298, %v508
        %v510 = vpop.f32.mrb[0].mxu0
        %v511 = vadd.f32 %v298, %v510
        %512 = vmatprep.mubr.f32.mxu0 0.0
        %513 = vmatmul.mubr.f32.gmra.mrb[0].mxu0 %v358
        %v514 = vpop.f32.mrb[0].mxu0
        %v515 = vadd.f32 %v303, %v514
        %v516 = vpop.f32.mrb[0].mxu0
        %v517 = vadd.f32 %v303, %v516
        %518 = vmatprep.mubr.f32.mxu0 0.0
        %519 = vmatmul.mubr.f32.gmra.mrb[0].mxu0 %v361
        %v520 = vpop.f32.mrb[0].mxu0
        %v521 = vadd.f32 %v308, %v520
        %v522 = vpop.f32.mrb[0].mxu0
        %v523 = vadd.f32 %v308, %v522
        %524 = vmatprep.mubr.f32.mxu0 0.0
        %525 = vmatmul.mubr.f32.gmra.mrb[0].mxu0 %v364
        %v526 = vpop.f32.mrb[0].mxu0
        %v527 = vadd.f32 %v313, %v526
        %v528 = vpop.f32.mrb[0].mxu0
        %v529 = vadd.f32 %v313, %v528
        %530 = vmatprep.mubr.f32.mxu0 0.0
        %531 = vmatmul.mubr.f32.gmra.mrb[0].mxu0 %v367
        %v532 = vpop.f32.mrb[0].mxu0
        %v533 = vadd.f32 %v318, %v532
        %v534 = vpop.f32.mrb[0].mxu0
        %v535 = vadd.f32 %v318, %v534
        %536 = vdwg.mxu0
        %537 = vst [vmem:[%s188] sm:$0xff] %v443
        %538 = vst [vmem:[%s188 + $0x8] sm:$0xff] %v445
        %539 = vst [vmem:[%s188 + $0x10] sm:$0xff] %v449
        %540 = vst [vmem:[%s188 + $0x18] sm:$0xff] %v451
        %541 = vst [vmem:[%s188 + $0x20] sm:$0xff] %v455
        %542 = vst [vmem:[%s188 + $0x28] sm:$0xff] %v457
        %543 = vst [vmem:[%s188 + $0x30] sm:$0xff] %v461
        %544 = vst [vmem:[%s188 + $0x38] sm:$0xff] %v463
        %545 = vst [vmem:[%s188 + $0x40] sm:$0xff] %v467
        %546 = vst [vmem:[%s188 + $0x48] sm:$0xff] %v469
        %547 = vst [vmem:[%s188 + $0x50] sm:$0xff] %v473
        %548 = vst [vmem:[%s188 + $0x58] sm:$0xff] %v475
        %549 = vst [vmem:[%s188 + $0x60] sm:$0xff] %v479
        %550 = vst [vmem:[%s188 + $0x68] sm:$0xff] %v481
        %551 = vst [vmem:[%s188 + $0x70] sm:$0xff] %v485
        %552 = vst [vmem:[%s188 + $0x78] sm:$0xff] %v487
        %553 = vst [vmem:[%s188 + $0x80] sm:$0xff] %v491
        %554 = vst [vmem:[%s188 + $0x88] sm:$0xff] %v493
        %555 = vst [vmem:[%s188 + $0x90] sm:$0xff] %v497
        %556 = vst [vmem:[%s188 + $0x98] sm:$0xff] %v499
        %557 = vst [vmem:[%s188 + $0xa0] sm:$0xff] %v503
        %558 = vst [vmem:[%s188 + $0xa8] sm:$0xff] %v505
        %559 = vst [vmem:[%s188 + $0xb0] sm:$0xff] %v509
        %560 = vst [vmem:[%s188 + $0xb8] sm:$0xff] %v511
        %561 = vst [vmem:[%s188 + $0xc0] sm:$0xff] %v515
        %562 = vst [vmem:[%s188 + $0xc8] sm:$0xff] %v517
        %563 = vst [vmem:[%s188 + $0xd0] sm:$0xff] %v521
        %564 = vst [vmem:[%s188 + $0xd8] sm:$0xff] %v523
        %565 = vst [vmem:[%s188 + $0xe0] sm:$0xff] %v527
        %566 = vst [vmem:[%s188 + $0xe8] sm:$0xff] %v529
        %567 = vst [vmem:[%s188 + $0xf0] sm:$0xff] %v533
        %568 = vst [vmem:[%s188 + $0xf8] sm:$0xff] %v535
        %s569 = sand.u32 %s109, 1
        %s570 = scalar_lea.sflag [#allocation3], %s569
        %s571 = sand.u32 %s109, 1
        %s572 = smul.addr %s571, 256
        %s573 = scalar_lea.vmem [#allocation2], %s572
        // Predicated region
        $region33: #{tpu_custom_call.1} parent=31 // pred_check
          %p574 = pneg %p119
        $region34: #{tpu_custom_call.1} parent=31 // pred_check_branch
          %576 = sbr.rel (%p574) target = $region36
        $region35: #{tpu_custom_call.1} parent=31 // pred_region
          %s577 = smul.u32 2, %s22
          %s579 = ssub.s32 4096, 4096
          %580 = vsyncadd %s570, %s579
          %s581 = smul.addr %s21, 32
          %s582 = sadd.s32 %s577, %s581
          %s583 = smul.addr %s582, 128
          %s584 = scalar_lea.hbm %s3, %s583
          %s585 = sshll.u32 %s573, 4
          %s586 = int_to_ptr.vmem [resolvable:$true] %s585
          %591 = dma.vmem_to_hbm [thread:$0]  %s586, 4096, %s584, %s570, 256, 256, 16
        $region36: #{tpu_custom_call.1} parent=31 // pred_fallthru
          _
      $region32: #{tpu_custom_call.1} parent=5 // pred_fallthru
        _
      %p592 = scmp.le.s32.totalorder 2, %s12
      // Predicated region
      $region37: #{tpu_custom_call.1} parent=5 // pred_check
        %p593 = pneg %p592
      $region38: #{tpu_custom_call.1} parent=5 // pred_check_branch
        %595 = sbr.rel (%p593) target = $region40
      $region39: #{tpu_custom_call.1} parent=5 // pred_region
        %s596 = ssub.s32 %s12, 2
        // Predicated region
        $region41: #{tpu_custom_call.1} parent=39 // pred_check
          %p597 = pneg %p125
        $region42: #{tpu_custom_call.1} parent=39 // pred_check_branch
          %599 = sbr.rel (%p597) target = $region44
        $region43: #{tpu_custom_call.1} parent=39 // pred_region
          %s600 = sand.u32 %s110, 1
          %s601 = scalar_lea.sflag [#allocation3], %s600
          %s602 = sand.u32 %s110, 1
          %s603 = smul.addr %s602, 256
          %s604 = scalar_lea.vmem [#allocation2], %s603
          %605 = dma.done %s601, 4096
        $region44: #{tpu_custom_call.1} parent=39 // pred_fallthru
          _
      $region40: #{tpu_custom_call.1} parent=5 // pred_fallthru
        _
    $region6: #{tpu_custom_call.1} parent=1 // loop_footer
      %s16 = sadd.s32 1, %s12
    $region7: #{tpu_custom_call.1} parent=1 // loop_footer_branch
      %11 = sbr.rel target = $region3
    $region8: #{tpu_custom_call.1} parent=1 // loop_exit
      _
    %606 = vsyncpa [#allocation3], 1
    %s607 = scalar_lea.sflag [#allocation3], 1
    %608 = vsyncpa %s607, 1

</llo_original>
